<compile_context>
chip_gen: v5e
topology: v5e:2x2
jax: 0.10.0
libtpu: 0.0.40
codegen_flags: <defaults>
</compile_context>

<pallas_src>
import numpy as np
import jax
import jax.numpy as jnp
from jax import lax
from jax.experimental import pallas as pl
from jax.experimental.pallas import tpu as pltpu

C_IN = 64
C_CONV = 96
C_OUT = C_IN + C_CONV          # 160 channels after concat
KH = KW = 3
KTAPS = KH * KW                # 9 taps  -> fused K = 9 * 64 = 576
STRIDE = 2
BN_EPS = 1e-3
TP_MAX = 512                   # spatial rows per block (multiple of 8)


def _mixed3a_kernel(p_ref, w_ref, s_ref, b_ref, o_ref):
    # p_ref: (1, TP, 576)  im2col patches, tap-major last axis (k*64 + c)
    # w_ref: (576, 96)     conv weight, rows ordered to match the patch axis
    # s_ref: (1, 96)       folded BN scale  (gamma / sqrt(var + eps))
    # b_ref: (1, 96)       folded BN bias   (beta - mean * scale)
    # o_ref: (1, TP, 160)  fused output: [:, :, :64]=maxpool, [:, :, 64:]=conv
    x = p_ref[0]                                                    # (TP, 576)

    # Conv branch: one long-K matmul on the MXU, f32 accumulation.
    acc = jnp.dot(x, w_ref[...], preferred_element_type=jnp.float32)  # (TP, 96)
    conv = jnp.maximum(acc * s_ref[...] + b_ref[...], 0.0)

    # Max-pool branch: elementwise max over the 9 taps (64-lane slices).
    pool = x[:, 0:C_IN]
    for k in range(1, KTAPS):
        pool = jnp.maximum(pool, x[:, k * C_IN:(k + 1) * C_IN])

    out = jnp.concatenate([pool.astype(jnp.float32), conv], axis=-1)
    o_ref[0] = out.astype(o_ref.dtype)


def mixed_3a(x_nchw, w_oihw, gamma, beta, run_mean, run_var,
             *, compute_dtype=jnp.bfloat16, nhwc_out=False):
    """x_nchw: (N, 64, H, W) -> (N, 160, Ho, Wo)   (or NHWC if nhwc_out)."""
    N, C, H, W = x_nchw.shape
    assert C == C_IN
    Ho = (H - KH) // STRIDE + 1
    Wo = (W - KW) // STRIDE + 1
    P = Ho * Wo
    TP = P if P <= TP_MAX else TP_MAX          # full dim, or a multiple of 8
    n_p = pl.cdiv(P, TP)

    # --- glue (plain JAX): layout + fused-K im2col + BN folding -------------
    # The NCHW->NHWC transpose is forced by the PyTorch interface; the bf16
    # cast and the tap gather fuse into that same XLA pass.
    x_nhwc = jnp.transpose(x_nchw, (0, 2, 3, 1)).astype(compute_dtype)
    taps = []
    for kh in range(KH):
        for kw in range(KW):
            taps.append(x_nhwc[:, kh:kh + 2 * Ho - 1:STRIDE,
                               kw:kw + 2 * Wo - 1:STRIDE, :])
    patches = jnp.concatenate(taps, axis=-1).reshape(N, P, KTAPS * C_IN)

    # (O, I, kh, kw) -> ((kh*3 + kw)*64 + i, O), matching the patch layout.
    w_mat = jnp.transpose(w_oihw, (2, 3, 1, 0)).reshape(KTAPS * C_IN, C_CONV)
    w_mat = w_mat.astype(compute_dtype)

    scale = (gamma / jnp.sqrt(run_var + BN_EPS)).astype(jnp.float32)
    bias = (beta - run_mean * scale).astype(jnp.float32)
    scale = scale.reshape(1, C_CONV)
    bias = bias.reshape(1, C_CONV)

    # --- hot path: Pallas kernel, grid over (batch, spatial tiles) ----------
    out = pl.pallas_call(
        _mixed3a_kernel,
        out_shape=jax.ShapeDtypeStruct((N, P, C_OUT), x_nchw.dtype),
        grid_spec=pltpu.PrefetchScalarGridSpec(
            num_scalar_prefetch=0,
            grid=(N, n_p),
            in_specs=[
                pl.BlockSpec((1, TP, KTAPS * C_IN), lambda n, p: (n, p, 0)),
                pl.BlockSpec((KTAPS * C_IN, C_CONV), lambda n, p: (0, 0)),
                pl.BlockSpec((1, C_CONV), lambda n, p: (0, 0)),
                pl.BlockSpec((1, C_CONV), lambda n, p: (0, 0)),
            ],
            out_specs=pl.BlockSpec((1, TP, C_OUT), lambda n, p: (n, p, 0)),
        ),
        compiler_params=pltpu.CompilerParams(
            dimension_semantics=("parallel", "parallel")),
    )(patches, w_mat, scale, bias)

    out = out.reshape(N, Ho, Wo, C_OUT)        # channels: [pool(64) | conv(96)]
    if nhwc_out:
        return out
    return jnp.transpose(out, (0, 3, 1, 2))    # NCHW for the PyTorch contract


def _reference(x, w, gamma, beta, run_mean, run_var):
    pool = lax.reduce_window(x, -jnp.inf, lax.max,
                             (1, 1, KH, KW), (1, 1, STRIDE, STRIDE), "VALID")
    conv = lax.conv_general_dilated(
        x, w, (STRIDE, STRIDE), "VALID",
        dimension_numbers=("NCHW", "OIHW", "NCHW"),
        precision=lax.Precision.HIGHEST)
    inv = 1.0 / jnp.sqrt(run_var + BN_EPS)
    bn = (conv - run_mean[None, :, None, None]) * inv[None, :, None, None]
    bn = bn * gamma[None, :, None, None] + beta[None, :, None, None]
    return jnp.concatenate([pool, jnp.maximum(bn, 0.0)], axis=1)


if __name__ == "__main__":
    key = jax.random.PRNGKey(0)
    kx, kw_, kg, kb, km, kv, kx2 = jax.random.split(key, 7)

    # Deterministic synthetic Conv2d weight + BatchNorm stats / affine params.
    w = 0.1 * jax.random.normal(kw_, (C_CONV, C_IN, KH, KW), dtype=jnp.float32)
    gamma = 1.0 + 0.1 * jax.random.normal(kg, (C_CONV,), dtype=jnp.float32)
    beta = 0.1 * jax.random.normal(kb, (C_CONV,), dtype=jnp.float32)
    run_mean = 0.1 * jax.random.normal(km, (C_CONV,), dtype=jnp.float32)
    run_var = 0.5 + jax.random.uniform(kv, (C_CONV,), dtype=jnp.float32)

    # Check 1: small shape, f32 compute path.
    N, H, W = 2, 16, 16
    x = jax.random.normal(kx, (N, C_IN, H, W), dtype=jnp.float32)
    out = jax.block_until_ready(
        mixed_3a(x, w, gamma, beta, run_mean, run_var,
                 compute_dtype=jnp.float32))
    ref = jax.block_until_ready(_reference(x, w, gamma, beta, run_mean, run_var))
    assert out.shape == (N, C_OUT, 7, 7), out.shape
    np.testing.assert_allclose(np.asarray(out), np.asarray(ref),
                               rtol=3e-2, atol=3e-2)

    # Check 2: spatial size large enough that P > TP (exercises the P-tiled
    # grid with a partial last tile), bf16 fast path (looser tolerance).
    N2, H2, W2 = 1, 51, 51                     # Ho = Wo = 25 -> P = 625
    x2 = jax.random.normal(kx2, (N2, C_IN, H2, W2), dtype=jnp.float32)
    out2 = jax.block_until_ready(
        mixed_3a(x2, w, gamma, beta, run_mean, run_var,
                 compute_dtype=jnp.bfloat16))
    ref2 = jax.block_until_ready(_reference(x2, w, gamma, beta, run_mean, run_var))
    assert out2.shape == (N2, C_OUT, 25, 25), out2.shape
    np.testing.assert_allclose(np.asarray(out2), np.asarray(ref2),
                               rtol=5e-2, atol=5e-2)

    print("KERNEL_OK")
</pallas_src>

<mosaic_0001>
module attributes {stable_mosaic.version = 11 : i64} {
  func.func @_mixed3a_kernel(%arg0: i32, %arg1: i32, %arg2: memref<1x49x576xf32, #tpu.memory_space<vmem>>, %arg3: memref<576x96xf32, #tpu.memory_space<vmem>>, %arg4: memref<1x96xf32, #tpu.memory_space<vmem>>, %arg5: memref<1x96xf32, #tpu.memory_space<vmem>>, %arg6: memref<1x49x160xf32, #tpu.memory_space<vmem>>) attributes {dimension_semantics = [#tpu.dimension_semantics<parallel>, #tpu.dimension_semantics<parallel>], iteration_bounds = array<i64: 2, 1>, scalar_prefetch = 0 : i64, scratch_operands = 0 : i64, tpu.core_type = #tpu.core_type<tc>, window_params = [{transform_indices = @transform_0, window_bounds = array<i64: 1, 49, 576>}, {pipeline_mode = #tpu.pipeline_mode<synchronous>, transform_indices = @transform_1, window_bounds = array<i64: 576, 96>}, {pipeline_mode = #tpu.pipeline_mode<synchronous>, transform_indices = @transform_2, window_bounds = array<i64: 1, 96>}, {pipeline_mode = #tpu.pipeline_mode<synchronous>, transform_indices = @transform_3, window_bounds = array<i64: 1, 96>}, {transform_indices = @transform_4, window_bounds = array<i64: 1, 49, 160>}]} {
    %c0 = arith.constant 0 : index
    %c0_0 = arith.constant 0 : index
    %c0_1 = arith.constant 0 : index
    %0 = vector.load %arg2[%c0, %c0_0, %c0_1] : memref<1x49x576xf32, #tpu.memory_space<vmem>>, vector<1x49x576xf32>
    %1 = vector.shape_cast %0 : vector<1x49x576xf32> to vector<49x576xf32>
    %c0_2 = arith.constant 0 : index
    %c0_3 = arith.constant 0 : index
    %2 = vector.load %arg3[%c0_2, %c0_3] : memref<576x96xf32, #tpu.memory_space<vmem>>, vector<576x96xf32>
    %cst = arith.constant dense<0.000000e+00> : vector<49x96xf32>
    %3 = tpu.matmul %1, %2, %cst {dimension_numbers = #tpu.dot_dimension_numbers<[1], [0], [0], [1], [0, 0, 1, 1], [], []>} : vector<49x576xf32>, vector<576x96xf32>, vector<49x96xf32> -> vector<49x96xf32>
    %c0_4 = arith.constant 0 : index
    %c0_5 = arith.constant 0 : index
    %4 = vector.load %arg4[%c0_4, %c0_5] : memref<1x96xf32, #tpu.memory_space<vmem>>, vector<1x96xf32>
    %5 = vector.broadcast %4 : vector<1x96xf32> to vector<49x96xf32>
    %6 = arith.mulf %3, %5 : vector<49x96xf32>
    %c0_6 = arith.constant 0 : index
    %c0_7 = arith.constant 0 : index
    %7 = vector.load %arg5[%c0_6, %c0_7] : memref<1x96xf32, #tpu.memory_space<vmem>>, vector<1x96xf32>
    %8 = vector.broadcast %7 : vector<1x96xf32> to vector<49x96xf32>
    %9 = arith.addf %6, %8 : vector<49x96xf32>
    %cst_8 = arith.constant 0.000000e+00 : f32
    %10 = vector.broadcast %cst_8 : f32 to vector<49x96xf32>
    %11 = arith.maximumf %9, %10 : vector<49x96xf32>
    %12 = vector.extract_strided_slice %1 {offsets = [0, 0], sizes = [49, 64], strides = [1, 1]} : vector<49x576xf32> to vector<49x64xf32>
    %13 = vector.extract_strided_slice %1 {offsets = [0, 64], sizes = [49, 64], strides = [1, 1]} : vector<49x576xf32> to vector<49x64xf32>
    %14 = arith.maximumf %12, %13 : vector<49x64xf32>
    %15 = vector.extract_strided_slice %1 {offsets = [0, 128], sizes = [49, 64], strides = [1, 1]} : vector<49x576xf32> to vector<49x64xf32>
    %16 = arith.maximumf %14, %15 : vector<49x64xf32>
    %17 = vector.extract_strided_slice %1 {offsets = [0, 192], sizes = [49, 64], strides = [1, 1]} : vector<49x576xf32> to vector<49x64xf32>
    %18 = arith.maximumf %16, %17 : vector<49x64xf32>
    %19 = vector.extract_strided_slice %1 {offsets = [0, 256], sizes = [49, 64], strides = [1, 1]} : vector<49x576xf32> to vector<49x64xf32>
    %20 = arith.maximumf %18, %19 : vector<49x64xf32>
    %21 = vector.extract_strided_slice %1 {offsets = [0, 320], sizes = [49, 64], strides = [1, 1]} : vector<49x576xf32> to vector<49x64xf32>
    %22 = arith.maximumf %20, %21 : vector<49x64xf32>
    %23 = vector.extract_strided_slice %1 {offsets = [0, 384], sizes = [49, 64], strides = [1, 1]} : vector<49x576xf32> to vector<49x64xf32>
    %24 = arith.maximumf %22, %23 : vector<49x64xf32>
    %25 = vector.extract_strided_slice %1 {offsets = [0, 448], sizes = [49, 64], strides = [1, 1]} : vector<49x576xf32> to vector<49x64xf32>
    %26 = arith.maximumf %24, %25 : vector<49x64xf32>
    %27 = vector.extract_strided_slice %1 {offsets = [0, 512], sizes = [49, 64], strides = [1, 1]} : vector<49x576xf32> to vector<49x64xf32>
    %28 = arith.maximumf %26, %27 : vector<49x64xf32>
    %29 = tpu.concatenate %28, %11 in 1 : vector<49x64xf32>, vector<49x96xf32> -> vector<49x160xf32>
    %c0_9 = arith.constant 0 : index
    %c0_10 = arith.constant 0 : index
    %c0_11 = arith.constant 0 : index
    %30 = vector.load %arg6[%c0_9, %c0_10, %c0_11] : memref<1x49x160xf32, #tpu.memory_space<vmem>>, vector<1x49x160xf32>
    %31 = vector.shape_cast %30 : vector<1x49x160xf32> to vector<49x160xf32>
    %32 = vector.shape_cast %29 : vector<49x160xf32> to vector<1x49x160xf32>
    tpu.vector_store %arg6[%c0_9, %c0_10, %c0_11], %32 {strides = array<i32>} : memref<1x49x160xf32, #tpu.memory_space<vmem>>, vector<1x49x160xf32>,
    return
  }
  func.func @transform_0(%arg0: i32, %arg1: i32) -> (i32, i32, i32) {
    %c0_i32 = arith.constant 0 : i32
    %c0_i32_0 = arith.constant 0 : i32
    return %arg0, %arg1, %c0_i32 : i32, i32, i32
  }
  func.func @transform_1(%arg0: i32, %arg1: i32) -> (i32, i32) {
    %c0_i32 = arith.constant 0 : i32
    %c0_i32_0 = arith.constant 0 : i32
    %c0_i32_1 = arith.constant 0 : i32
    return %c0_i32, %c0_i32_0 : i32, i32
  }
  func.func @transform_2(%arg0: i32, %arg1: i32) -> (i32, i32) {
    %c0_i32 = arith.constant 0 : i32
    %c0_i32_0 = arith.constant 0 : i32
    %c0_i32_1 = arith.constant 0 : i32
    return %c0_i32, %c0_i32_0 : i32, i32
  }
  func.func @transform_3(%arg0: i32, %arg1: i32) -> (i32, i32) {
    %c0_i32 = arith.constant 0 : i32
    %c0_i32_0 = arith.constant 0 : i32
    %c0_i32_1 = arith.constant 0 : i32
    return %c0_i32, %c0_i32_0 : i32, i32
  }
  func.func @transform_4(%arg0: i32, %arg1: i32) -> (i32, i32, i32) {
    %c0_i32 = arith.constant 0 : i32
    %c0_i32_0 = arith.constant 0 : i32
    return %arg0, %arg1, %c0_i32 : i32, i32, i32
  }
}

</mosaic_0001>

<llo_original>
// kernel: tpu_custom_call.1
$region0: #{tpu_custom_call.1}
  #allocation0 [shape = 'u32[]', space=smem, size = 0x4, offset = 0x4, fixed_abs, tag = 'smem constant byte address 0x4 - core index']
  #allocation1 [shape = 'u32[72,128]{1,0:T(1,128)}', space=vmem, size = 0x9000, scoped, tag = 'internal scratch']
  %s0 = inlined_call_operand.vmem [shape: f32[2,49,576], index: 0, kind: input, shape index: {}]
  %s1 = inlined_call_operand.vmem [shape: f32[576,96], index: 1, kind: input, shape index: {}]
  %s2 = inlined_call_operand.vmem [shape: f32[1,96], index: 2, kind: input, shape index: {}]
  %s3 = inlined_call_operand.vmem [shape: f32[1,96], index: 3, kind: input, shape index: {}]
  %s4 = inlined_call_operand.vmem [shape: f32[2,49,160], index: 4, kind: output, shape index: {}]
  %s5 = sld [smem:[#allocation0]]
  $region49: #{tpu_custom_call.1} parent=0
    _
  %s7 = ssub.s32 1, %s5
  %s8 = scalar_select 0, %s7, %s5
  loop: start=0, step=1, limit=4
  $region2: #{tpu_custom_call.1} parent=0 // loop_pre_header
    _
  $region3: #{tpu_custom_call.1} parent=0 // loop_header
    %s10 = sphi 0, %s14
    %p11 = scmp.ge.s32.totalorder %s10, 4
    %s17 = sphi 0, %s29
    %s18 = sphi 0, %s25
    %s19 = sphi 0, %s17
    %s20 = sphi 0, %s18
    %s21 = sphi 0, %s19
    %s22 = sphi 0, %s20
    %s34 = sphi 0, %s36
    %s37 = sphi 0, %s34
    %s38 = sphi 0, %s37
    %s54 = sphi 0, %s38
    %s58 = sphi 0, %s58
    %s60 = sphi 0, %s58
    %s61 = sphi 0, %s60
    %s75 = sphi 0, %s61
    %s79 = sphi 0, %s79
    %s81 = sphi 0, %s79
    %s82 = sphi 0, %s81
    %s96 = sphi 0, %s82
    %s100 = sphi 0, %s100
    %s102 = sphi 0, %s100
    %s103 = sphi 0, %s102
    %s117 = sphi 0, %s103
    %s125 = sphi 0, %s127
    %s128 = sphi 0, %s125
    %s129 = sphi 0, %s128
    %s145 = sphi 0, %s129
  $region4: #{tpu_custom_call.1} parent=0 // loop_header_branch
    %13 = sbr.rel (%p11) target = $region8
  $region5: #{tpu_custom_call.1} parent=0 // loop_body
    %s15 = ssub.s32 %s10, 1
    %s16 = ssub.s32 %s10, 2
    %s23 = sadd.s32 1, %s18
    %p24 = scmp.ge.s32.totalorder %s23, 1
    %s25 = scalar_select %p24, 0, %s23
    %s26 = sadd.s32 1, %s17
    %s27 = scalar_select %p24, %s26, %s17
    %p28 = scmp.ge.s32.totalorder %s27, 2
    %s29 = scalar_select %p28, 0, %s27
    %s30 = ssub.s32 %s17, %s29
    %s31 = ssub.s32 %s18, %s25
    %s32 = sor.u32 %s30, %s31
    %p33 = scmp.eq.s32.totalorder %s32, 0
    %s35 = sadd.s32 %s34, 1
    %s36 = scalar_select %p33, %s34, %s35
    %p39 = pneg %p33
    %p40 = scmp.eq.s32.totalorder %s10, 1
    %p41 = por %p39, %p40
    %p42 = scmp.ne.s32.totalorder %s34, %s37
    %p43 = scmp.eq.s32.totalorder %s10, 0
    %p44 = por %p42, %p43
    %p45 = scmp.ne.s32.totalorder %s34, %s37
    %p46 = scmp.eq.s32.totalorder %s15, 1
    %p47 = por %p45, %p46
    %p48 = scmp.ne.s32.totalorder %s37, %s38
    %p49 = scmp.eq.s32.totalorder %s15, 0
    %p50 = por %p48, %p49
    %p51 = scmp.ne.s32.totalorder %s37, %s38
    %p52 = scmp.eq.s32.totalorder %s16, 1
    %p53 = por %p51, %p52
    %p55 = scmp.ne.s32.totalorder %s38, %s54
    %p56 = scmp.eq.s32.totalorder %s16, 0
    %p57 = por %p55, %p56
    %s59 = sadd.s32 %s58, 1
    %p62 = scmp.eq.s32.totalorder %s10, 1
    %p63 = scmp.ne.s32.totalorder %s58, %s60
    %p64 = scmp.eq.s32.totalorder %s10, 0
    %p65 = por %p63, %p64
    %p66 = scmp.ne.s32.totalorder %s58, %s60
    %p67 = scmp.eq.s32.totalorder %s15, 1
    %p68 = por %p66, %p67
    %p69 = scmp.ne.s32.totalorder %s60, %s61
    %p70 = scmp.eq.s32.totalorder %s15, 0
    %p71 = por %p69, %p70
    %p72 = scmp.ne.s32.totalorder %s60, %s61
    %p73 = scmp.eq.s32.totalorder %s16, 1
    %p74 = por %p72, %p73
    %p76 = scmp.ne.s32.totalorder %s61, %s75
    %p77 = scmp.eq.s32.totalorder %s16, 0
    %p78 = por %p76, %p77
    %s80 = sadd.s32 %s79, 1
    %p83 = scmp.eq.s32.totalorder %s10, 1
    %p84 = scmp.ne.s32.totalorder %s79, %s81
    %p85 = scmp.eq.s32.totalorder %s10, 0
    %p86 = por %p84, %p85
    %p87 = scmp.ne.s32.totalorder %s79, %s81
    %p88 = scmp.eq.s32.totalorder %s15, 1
    %p89 = por %p87, %p88
    %p90 = scmp.ne.s32.totalorder %s81, %s82
    %p91 = scmp.eq.s32.totalorder %s15, 0
    %p92 = por %p90, %p91
    %p93 = scmp.ne.s32.totalorder %s81, %s82
    %p94 = scmp.eq.s32.totalorder %s16, 1
    %p95 = por %p93, %p94
    %p97 = scmp.ne.s32.totalorder %s82, %s96
    %p98 = scmp.eq.s32.totalorder %s16, 0
    %p99 = por %p97, %p98
    %s101 = sadd.s32 %s100, 1
    %p104 = scmp.eq.s32.totalorder %s10, 1
    %p105 = scmp.ne.s32.totalorder %s100, %s102
    %p106 = scmp.eq.s32.totalorder %s10, 0
    %p107 = por %p105, %p106
    %p108 = scmp.ne.s32.totalorder %s100, %s102
    %p109 = scmp.eq.s32.totalorder %s15, 1
    %p110 = por %p108, %p109
    %p111 = scmp.ne.s32.totalorder %s102, %s103
    %p112 = scmp.eq.s32.totalorder %s15, 0
    %p113 = por %p111, %p112
    %p114 = scmp.ne.s32.totalorder %s102, %s103
    %p115 = scmp.eq.s32.totalorder %s16, 1
    %p116 = por %p114, %p115
    %p118 = scmp.ne.s32.totalorder %s103, %s117
    %p119 = scmp.eq.s32.totalorder %s16, 0
    %p120 = por %p118, %p119
    %s121 = ssub.s32 %s17, %s29
    %s122 = ssub.s32 %s18, %s25
    %s123 = sor.u32 %s121, %s122
    %p124 = scmp.eq.s32.totalorder %s123, 0
    %s126 = sadd.s32 %s125, 1
    %s127 = scalar_select %p124, %s125, %s126
    %p130 = pneg %p124
    %p131 = scmp.eq.s32.totalorder %s10, 1
    %p132 = por %p130, %p131
    %p133 = scmp.ne.s32.totalorder %s125, %s128
    %p134 = scmp.eq.s32.totalorder %s10, 0
    %p135 = por %p133, %p134
    %p136 = scmp.ne.s32.totalorder %s125, %s128
    %p137 = scmp.eq.s32.totalorder %s15, 1
    %p138 = por %p136, %p137
    %p139 = scmp.ne.s32.totalorder %s128, %s129
    %p140 = scmp.eq.s32.totalorder %s15, 0
    %p141 = por %p139, %p140
    %p142 = scmp.ne.s32.totalorder %s128, %s129
    %p143 = scmp.eq.s32.totalorder %s16, 1
    %p144 = por %p142, %p143
    %p146 = scmp.ne.s32.totalorder %s129, %s145
    %p147 = scmp.eq.s32.totalorder %s16, 0
    %p148 = por %p146, %p147
    %p149 = scmp.le.s32.totalorder 1, %s10
    %p150 = scmp.lt.s32.totalorder %s10, 3
    %p151 = pnand %p149, %p150
    %p152 = pneg %p151
    // Predicated region
    $region9: #{tpu_custom_call.1} parent=5 // pred_check
      _
    $region10: #{tpu_custom_call.1} parent=5 // pred_check_branch
      %154 = sbr.rel (%p151) target = $region12
    $region11: #{tpu_custom_call.1} parent=5 // pred_region
      %s155 = ssub.s32 %s10, 1
      // Predicated region
      $region13: #{tpu_custom_call.1} parent=11 // pred_check
        %p156 = pneg %p71
      $region14: #{tpu_custom_call.1} parent=11 // pred_check_branch
        %158 = sbr.rel (%p156) target = $region16
      $region15: #{tpu_custom_call.1} parent=11 // pred_region
        _
      $region16: #{tpu_custom_call.1} parent=11 // pred_fallthru
        _
      // Predicated region
      $region17: #{tpu_custom_call.1} parent=11 // pred_check
        %p159 = pneg %p92
      $region18: #{tpu_custom_call.1} parent=11 // pred_check_branch
        %161 = sbr.rel (%p159) target = $region20
      $region19: #{tpu_custom_call.1} parent=11 // pred_region
        _
      $region20: #{tpu_custom_call.1} parent=11 // pred_fallthru
        _
      // Predicated region
      $region21: #{tpu_custom_call.1} parent=11 // pred_check
        %p162 = pneg %p113
      $region22: #{tpu_custom_call.1} parent=11 // pred_check_branch
        %164 = sbr.rel (%p162) target = $region24
      $region23: #{tpu_custom_call.1} parent=11 // pred_region
        _
      $region24: #{tpu_custom_call.1} parent=11 // pred_fallthru
        _
    $region12: #{tpu_custom_call.1} parent=5 // pred_fallthru
      _
    %p165 = scmp.lt.s32.totalorder %s10, 2
    // Predicated region
    $region25: #{tpu_custom_call.1} parent=5 // pred_check
      %p166 = pneg %p165
    $region26: #{tpu_custom_call.1} parent=5 // pred_check_branch
      %168 = sbr.rel (%p166) target = $region28
    $region27: #{tpu_custom_call.1} parent=5 // pred_region
      // Predicated region
      $region29: #{tpu_custom_call.1} parent=27 // pred_check
        %p169 = pneg %p44
      $region30: #{tpu_custom_call.1} parent=27 // pred_check_branch
        %171 = sbr.rel (%p169) target = $region32
      $region31: #{tpu_custom_call.1} parent=27 // pred_region
        %s172 = smul.u32 7, %s18
        %p173 = scmp.lt.s32.totalorder %s17, 1
        %s174 = scalar_select %p173, %s17, 1
        %p175 = scmp.lt.s32.totalorder %s172, 6
        %s176 = scalar_select %p175, %s172, 6
        %s177 = smul.addr %s176, 5
        %s178 = smul.addr %s174, 35
        %s179 = sadd.s32 %s177, %s178
        %s180 = smul.addr %s179, 8
        %s181 = scalar_lea.vmem %s0, %s180
        %s182 = smul.u32 7, %s18
      $region32: #{tpu_custom_call.1} parent=27 // pred_fallthru
        _
    $region28: #{tpu_custom_call.1} parent=5 // pred_fallthru
      _
    %p183 = scmp.le.s32.totalorder 1, %s10
    %p184 = scmp.lt.s32.totalorder %s10, 3
    %p185 = pnand %p183, %p184
    %p186 = pneg %p185
    // Predicated region
    $region33: #{tpu_custom_call.1} parent=5 // pred_check
      _
    $region34: #{tpu_custom_call.1} parent=5 // pred_check_branch
      %188 = sbr.rel (%p185) target = $region36
    $region35: #{tpu_custom_call.1} parent=5 // pred_region
      %s189 = ssub.s32 %s10, 1
      %s190 = smul.u32 7, %s20
      %p191 = scmp.lt.s32.totalorder %s19, 1
      %s192 = scalar_select %p191, %s19, 1
      %p193 = scmp.lt.s32.totalorder %s190, 6
      %s194 = scalar_select %p193, %s190, 6
      %s195 = smul.addr %s194, 5
      %s196 = smul.addr %s192, 35
      %s197 = sadd.s32 %s195, %s196
      %s198 = smul.addr %s197, 8
      %s199 = scalar_lea.vmem %s0, %s198
      %p200 = pneg %p50
      %p201 = pneg %p47
      %p202 = pneg %p71
      %p203 = pneg %p68
      %p204 = pneg %p92
      %p205 = pneg %p89
      %p206 = pneg %p113
      %p207 = pneg %p110
      %p208 = pneg %p141
      %p209 = pneg %p138
      %s210 = smul.u32 7, %s20
      %p211 = scmp.lt.s32.totalorder %s19, 1
      %s212 = scalar_select %p211, %s19, 1
      %p213 = scmp.lt.s32.totalorder %s210, 6
      %s214 = scalar_select %p213, %s210, 6
      %s215 = smul.addr %s214, 2
      %s216 = smul.addr %s212, 14
      %s217 = sadd.s32 %s215, %s216
      %s218 = smul.addr %s217, 8
      %s219 = scalar_lea.vmem %s4, %s218
      %s220 = smul.u32 7, %s20
      %p221 = scmp.lt.s32.totalorder %s19, 1
      %s222 = scalar_select %p221, %s19, 1
      %p223 = scmp.lt.s32.totalorder %s220, 6
      %s224 = scalar_select %p223, %s220, 6
      %s225 = smul.addr %s224, 5
      %s226 = smul.addr %s222, 35
      %s227 = sadd.s32 %s225, %s226
      %s228 = smul.addr %s227, 8
      %s229 = scalar_lea.vmem %s0, %s228
      %s230 = smul.u32 7, %s20
      %s231 = smul.u32 7, %s20
      %p232 = scmp.lt.s32.totalorder %s19, 1
      %s233 = scalar_select %p232, %s19, 1
      %p234 = scmp.lt.s32.totalorder %s231, 6
      %s235 = scalar_select %p234, %s231, 6
      %s236 = smul.addr %s235, 2
      %s237 = smul.addr %s233, 14
      %s238 = sadd.s32 %s236, %s237
      %s239 = smul.addr %s238, 8
      %s240 = scalar_lea.vmem %s4, %s239
      %s241 = smul.u32 7, %s20
      %v242 = vld [vmem:[%s229] sm:$0xff]
      %v243 = vld [vmem:[%s229 + $0x8] sm:$0xff]
      %v244 = vld [vmem:[%s229 + $0x10] sm:$0xff]
      %v245 = vld [vmem:[%s229 + $0x18] sm:$0xff]
      %v246 = vld [vmem:[%s229 + $0x20] sm:$0xff]
      %v247 = vld [vmem:[%s229 + $0x28] sm:$0xff]
      %v248 = vld [vmem:[%s229 + $0x30] sm:$0xff]
      %v249 = vld [vmem:[%s229 + $0x38] sm:$0xff]
      %v250 = vld [vmem:[%s229 + $0x40] sm:$0xff]
      %v251 = vld [vmem:[%s229 + $0x48] sm:$0xff]
      %v252 = vld [vmem:[%s229 + $0x50] sm:$0xff]
      %v253 = vld [vmem:[%s229 + $0x58] sm:$0xff]
      %v254 = vld [vmem:[%s229 + $0x60] sm:$0xff]
      %v255 = vld [vmem:[%s229 + $0x68] sm:$0xff]
      %v256 = vld [vmem:[%s229 + $0x70] sm:$0xff]
      %v257 = vld [vmem:[%s229 + $0x78] sm:$0xff]
      %v258 = vld [vmem:[%s229 + $0x80] sm:$0xff]
      %v259 = vld [vmem:[%s229 + $0x88] sm:$0xff]
      %v260 = vld [vmem:[%s229 + $0x90] sm:$0xff]
      %v261 = vld [vmem:[%s229 + $0x98] sm:$0xff]
      %v262 = vld [vmem:[%s229 + $0xa0] sm:$0xff]
      %v263 = vld [vmem:[%s229 + $0xa8] sm:$0xff]
      %v264 = vld [vmem:[%s229 + $0xb0] sm:$0xff]
      %v265 = vld [vmem:[%s229 + $0xb8] sm:$0xff]
      %v266 = vld [vmem:[%s229 + $0xc0] sm:$0xff]
      %v267 = vld [vmem:[%s229 + $0xc8] sm:$0xff]
      %v268 = vld [vmem:[%s229 + $0xd0] sm:$0xff]
      %v269 = vld [vmem:[%s229 + $0xd8] sm:$0xff]
      %v270 = vld [vmem:[%s229 + $0xe0] sm:$0xff]
      %v271 = vld [vmem:[%s229 + $0xe8] sm:$0xff]
      %v272 = vld [vmem:[%s229 + $0xf0] sm:$0x1]
      %v273 = vld [vmem:[%s229 + $0xf8] sm:$0x1]
      %v274 = vld [vmem:[%s229 + $0x100] sm:$0x1]
      %v275 = vld [vmem:[%s229 + $0x108] sm:$0x1]
      %v276 = vld [vmem:[%s229 + $0x110] sm:$0x1]
      %v277 = vld [vmem:[%s1] sm:$0xff]
      %v278 = vld [vmem:[%s1 + $0x8] sm:$0xff]
      %v279 = vld [vmem:[%s1 + $0x10] sm:$0xff]
      %v280 = vld [vmem:[%s1 + $0x18] sm:$0xff]
      %v281 = vld [vmem:[%s1 + $0x20] sm:$0xff]
      %v282 = vld [vmem:[%s1 + $0x28] sm:$0xff]
      %v283 = vld [vmem:[%s1 + $0x30] sm:$0xff]
      %v284 = vld [vmem:[%s1 + $0x38] sm:$0xff]
      %v285 = vld [vmem:[%s1 + $0x40] sm:$0xff]
      %v286 = vld [vmem:[%s1 + $0x48] sm:$0xff]
      %v287 = vld [vmem:[%s1 + $0x50] sm:$0xff]
      %v288 = vld [vmem:[%s1 + $0x58] sm:$0xff]
      %v289 = vld [vmem:[%s1 + $0x60] sm:$0xff]
      %v290 = vld [vmem:[%s1 + $0x68] sm:$0xff]
      %v291 = vld [vmem:[%s1 + $0x70] sm:$0xff]
      %v292 = vld [vmem:[%s1 + $0x78] sm:$0xff]
      %v293 = vld [vmem:[%s1 + $0x80] sm:$0xff]
      %v294 = vld [vmem:[%s1 + $0x88] sm:$0xff]
      %v295 = vld [vmem:[%s1 + $0x90] sm:$0xff]
      %v296 = vld [vmem:[%s1 + $0x98] sm:$0xff]
      %v297 = vld [vmem:[%s1 + $0xa0] sm:$0xff]
      %v298 = vld [vmem:[%s1 + $0xa8] sm:$0xff]
      %v299 = vld [vmem:[%s1 + $0xb0] sm:$0xff]
      %v300 = vld [vmem:[%s1 + $0xb8] sm:$0xff]
      %v301 = vld [vmem:[%s1 + $0xc0] sm:$0xff]
      %v302 = vld [vmem:[%s1 + $0xc8] sm:$0xff]
      %v303 = vld [vmem:[%s1 + $0xd0] sm:$0xff]
      %v304 = vld [vmem:[%s1 + $0xd8] sm:$0xff]
      %v305 = vld [vmem:[%s1 + $0xe0] sm:$0xff]
      %v306 = vld [vmem:[%s1 + $0xe8] sm:$0xff]
      %v307 = vld [vmem:[%s1 + $0xf0] sm:$0xff]
      %v308 = vld [vmem:[%s1 + $0xf8] sm:$0xff]
      %v309 = vld [vmem:[%s1 + $0x100] sm:$0xff]
      %v310 = vld [vmem:[%s1 + $0x108] sm:$0xff]
      %v311 = vld [vmem:[%s1 + $0x110] sm:$0xff]
      %v312 = vld [vmem:[%s1 + $0x118] sm:$0xff]
      %v313 = vld [vmem:[%s1 + $0x120] sm:$0xff]
      %v314 = vld [vmem:[%s1 + $0x128] sm:$0xff]
      %v315 = vld [vmem:[%s1 + $0x130] sm:$0xff]
      %v316 = vld [vmem:[%s1 + $0x138] sm:$0xff]
      %v317 = vld [vmem:[%s1 + $0x140] sm:$0xff]
      %v318 = vld [vmem:[%s1 + $0x148] sm:$0xff]
      %v319 = vld [vmem:[%s1 + $0x150] sm:$0xff]
      %v320 = vld [vmem:[%s1 + $0x158] sm:$0xff]
      %v321 = vld [vmem:[%s1 + $0x160] sm:$0xff]
      %v322 = vld [vmem:[%s1 + $0x168] sm:$0xff]
      %v323 = vld [vmem:[%s1 + $0x170] sm:$0xff]
      %v324 = vld [vmem:[%s1 + $0x178] sm:$0xff]
      %v325 = vld [vmem:[%s1 + $0x180] sm:$0xff]
      %v326 = vld [vmem:[%s1 + $0x188] sm:$0xff]
      %v327 = vld [vmem:[%s1 + $0x190] sm:$0xff]
      %v328 = vld [vmem:[%s1 + $0x198] sm:$0xff]
      %v329 = vld [vmem:[%s1 + $0x1a0] sm:$0xff]
      %v330 = vld [vmem:[%s1 + $0x1a8] sm:$0xff]
      %v331 = vld [vmem:[%s1 + $0x1b0] sm:$0xff]
      %v332 = vld [vmem:[%s1 + $0x1b8] sm:$0xff]
      %v333 = vld [vmem:[%s1 + $0x1c0] sm:$0xff]
      %v334 = vld [vmem:[%s1 + $0x1c8] sm:$0xff]
      %v335 = vld [vmem:[%s1 + $0x1d0] sm:$0xff]
      %v336 = vld [vmem:[%s1 + $0x1d8] sm:$0xff]
      %v337 = vld [vmem:[%s1 + $0x1e0] sm:$0xff]
      %v338 = vld [vmem:[%s1 + $0x1e8] sm:$0xff]
      %v339 = vld [vmem:[%s1 + $0x1f0] sm:$0xff]
      %v340 = vld [vmem:[%s1 + $0x1f8] sm:$0xff]
      %v341 = vld [vmem:[%s1 + $0x200] sm:$0xff]
      %v342 = vld [vmem:[%s1 + $0x208] sm:$0xff]
      %v343 = vld [vmem:[%s1 + $0x210] sm:$0xff]
      %v344 = vld [vmem:[%s1 + $0x218] sm:$0xff]
      %v345 = vld [vmem:[%s1 + $0x220] sm:$0xff]
      %v346 = vld [vmem:[%s1 + $0x228] sm:$0xff]
      %v347 = vld [vmem:[%s1 + $0x230] sm:$0xff]
      %v348 = vld [vmem:[%s1 + $0x238] sm:$0xff]
      %vm349 = vcmask 523264
      %v351 = vsel %vm349, %v246, 0
      %v354 = vsel %vm349, %v251, 0
      %v357 = vsel %vm349, %v256, 0
      %v360 = vsel %vm349, %v261, 0
      %v363 = vsel %vm349, %v266, 0
      %v366 = vsel %vm349, %v271, 0
      %v369 = vsel %vm349, %v276, 0
      %371 = vmatpush.msra.mxu0 %v292
      %372 = vmatpush.msra.mxu0 %v291
      %373 = vmatpush.msra.mxu0 %v290
      %374 = vmatpush.msra.mxu0 %v289
      %375 = vmatpush.msra.mxu0 %v288
      %376 = vmatpush.msra.mxu0 %v287
      %377 = vmatpush.msra.mxu0 %v286
      %378 = vmatpush.msra.mxu0 %v285
      %379 = vmatpush.msra.mxu0 %v284
      %380 = vmatpush.msra.mxu0 %v283
      %381 = vmatpush.msra.mxu0 %v282
      %382 = vmatpush.msra.mxu0 %v281
      %383 = vmatpush.msra.mxu0 %v280
      %384 = vmatpush.msra.mxu0 %v279
      %385 = vmatpush.msra.mxu0 %v278
      %386 = vmatpush.msra.mxu0 %v277
      %387 = vmatmul.f32.gmra.mxu0 %v242
      %v388 = vpop.f32.mrf.mxu0
      %v389 = vadd.f32 0.0, %v388
      %390 = vmatmul.f32.gmra.mxu0 %v247
      %v391 = vpop.f32.mrf.mxu0
      %v392 = vadd.f32 0.0, %v391
      %393 = vmatmul.f32.gmra.mxu0 %v252
      %v394 = vpop.f32.mrf.mxu0
      %v395 = vadd.f32 0.0, %v394
      %396 = vmatmul.f32.gmra.mxu0 %v257
      %v397 = vpop.f32.mrf.mxu0
      %v398 = vadd.f32 0.0, %v397
      %399 = vmatmul.f32.gmra.mxu0 %v262
      %v400 = vpop.f32.mrf.mxu0
      %v401 = vadd.f32 0.0, %v400
      %402 = vmatmul.f32.gmra.mxu0 %v267
      %v403 = vpop.f32.mrf.mxu0
      %v404 = vadd.f32 0.0, %v403
      %405 = vmatmul.f32.gmra.mxu0 %v272
      %v406 = vpop.f32.mrf.mxu0
      %v407 = vadd.f32 0.0, %v406
      %408 = vdwg.mxu0
      %409 = vmatpush.msra.mxu0 %v308
      %410 = vmatpush.msra.mxu0 %v307
      %411 = vmatpush.msra.mxu0 %v306
      %412 = vmatpush.msra.mxu0 %v305
      %413 = vmatpush.msra.mxu0 %v304
      %414 = vmatpush.msra.mxu0 %v303
      %415 = vmatpush.msra.mxu0 %v302
      %416 = vmatpush.msra.mxu0 %v301
      %417 = vmatpush.msra.mxu0 %v300
      %418 = vmatpush.msra.mxu0 %v299
      %419 = vmatpush.msra.mxu0 %v298
      %420 = vmatpush.msra.mxu0 %v297
      %421 = vmatpush.msra.mxu0 %v296
      %422 = vmatpush.msra.mxu0 %v295
      %423 = vmatpush.msra.mxu0 %v294
      %424 = vmatpush.msra.mxu0 %v293
      %425 = vmatmul.f32.gmra.mxu0 %v243
      %v426 = vpop.f32.mrf.mxu0
      %v427 = vadd.f32 %v389, %v426
      %428 = vmatmul.f32.gmra.mxu0 %v248
      %v429 = vpop.f32.mrf.mxu0
      %v430 = vadd.f32 %v392, %v429
      %431 = vmatmul.f32.gmra.mxu0 %v253
      %v432 = vpop.f32.mrf.mxu0
      %v433 = vadd.f32 %v395, %v432
      %434 = vmatmul.f32.gmra.mxu0 %v258
      %v435 = vpop.f32.mrf.mxu0
      %v436 = vadd.f32 %v398, %v435
      %437 = vmatmul.f32.gmra.mxu0 %v263
      %v438 = vpop.f32.mrf.mxu0
      %v439 = vadd.f32 %v401, %v438
      %440 = vmatmul.f32.gmra.mxu0 %v268
      %v441 = vpop.f32.mrf.mxu0
      %v442 = vadd.f32 %v404, %v441
      %443 = vmatmul.f32.gmra.mxu0 %v273
      %v444 = vpop.f32.mrf.mxu0
      %v445 = vadd.f32 %v407, %v444
      %446 = vdwg.mxu0
      %447 = vmatpush.msra.mxu0 %v324
      %448 = vmatpush.msra.mxu0 %v323
      %449 = vmatpush.msra.mxu0 %v322
      %450 = vmatpush.msra.mxu0 %v321
      %451 = vmatpush.msra.mxu0 %v320
      %452 = vmatpush.msra.mxu0 %v319
      %453 = vmatpush.msra.mxu0 %v318
      %454 = vmatpush.msra.mxu0 %v317
      %455 = vmatpush.msra.mxu0 %v316
      %456 = vmatpush.msra.mxu0 %v315
      %457 = vmatpush.msra.mxu0 %v314
      %458 = vmatpush.msra.mxu0 %v313
      %459 = vmatpush.msra.mxu0 %v312
      %460 = vmatpush.msra.mxu0 %v311
      %461 = vmatpush.msra.mxu0 %v310
      %462 = vmatpush.msra.mxu0 %v309
      %463 = vmatmul.f32.gmra.mxu0 %v244
      %v464 = vpop.f32.mrf.mxu0
      %v465 = vadd.f32 %v427, %v464
      %466 = vmatmul.f32.gmra.mxu0 %v249
      %v467 = vpop.f32.mrf.mxu0
      %v468 = vadd.f32 %v430, %v467
      %469 = vmatmul.f32.gmra.mxu0 %v254
      %v470 = vpop.f32.mrf.mxu0
      %v471 = vadd.f32 %v433, %v470
      %472 = vmatmul.f32.gmra.mxu0 %v259
      %v473 = vpop.f32.mrf.mxu0
      %v474 = vadd.f32 %v436, %v473
      %475 = vmatmul.f32.gmra.mxu0 %v264
      %v476 = vpop.f32.mrf.mxu0
      %v477 = vadd.f32 %v439, %v476
      %478 = vmatmul.f32.gmra.mxu0 %v269
      %v479 = vpop.f32.mrf.mxu0
      %v480 = vadd.f32 %v442, %v479
      %481 = vmatmul.f32.gmra.mxu0 %v274
      %v482 = vpop.f32.mrf.mxu0
      %v483 = vadd.f32 %v445, %v482
      %484 = vdwg.mxu0
      %485 = vmatpush.msra.mxu0 %v340
      %486 = vmatpush.msra.mxu0 %v339
      %487 = vmatpush.msra.mxu0 %v338
      %488 = vmatpush.msra.mxu0 %v337
      %489 = vmatpush.msra.mxu0 %v336
      %490 = vmatpush.msra.mxu0 %v335
      %491 = vmatpush.msra.mxu0 %v334
      %492 = vmatpush.msra.mxu0 %v333
      %493 = vmatpush.msra.mxu0 %v332
      %494 = vmatpush.msra.mxu0 %v331
      %495 = vmatpush.msra.mxu0 %v330
      %496 = vmatpush.msra.mxu0 %v329
      %497 = vmatpush.msra.mxu0 %v328
      %498 = vmatpush.msra.mxu0 %v327
      %499 = vmatpush.msra.mxu0 %v326
      %500 = vmatpush.msra.mxu0 %v325
      %501 = vmatmul.f32.gmra.mxu0 %v245
      %v502 = vpop.f32.mrf.mxu0
      %v503 = vadd.f32 %v465, %v502
      %504 = vmatmul.f32.gmra.mxu0 %v250
      %v505 = vpop.f32.mrf.mxu0
      %v506 = vadd.f32 %v468, %v505
      %507 = vmatmul.f32.gmra.mxu0 %v255
      %v508 = vpop.f32.mrf.mxu0
      %v509 = vadd.f32 %v471, %v508
      %510 = vmatmul.f32.gmra.mxu0 %v260
      %v511 = vpop.f32.mrf.mxu0
      %v512 = vadd.f32 %v474, %v511
      %513 = vmatmul.f32.gmra.mxu0 %v265
      %v514 = vpop.f32.mrf.mxu0
      %v515 = vadd.f32 %v477, %v514
      %516 = vmatmul.f32.gmra.mxu0 %v270
      %v517 = vpop.f32.mrf.mxu0
      %v518 = vadd.f32 %v480, %v517
      %519 = vmatmul.f32.gmra.mxu0 %v275
      %v520 = vpop.f32.mrf.mxu0
      %v521 = vadd.f32 %v483, %v520
      %522 = vdwg.mxu0
      %523 = vmatpush.msra.mxu0 0.0
      %524 = vmatpush.msra.mxu0 0.0
      %525 = vmatpush.msra.mxu0 0.0
      %526 = vmatpush.msra.mxu0 0.0
      %527 = vmatpush.msra.mxu0 0.0
      %528 = vmatpush.msra.mxu0 0.0
      %529 = vmatpush.msra.mxu0 0.0
      %530 = vmatpush.msra.mxu0 0.0
      %531 = vmatpush.msra.mxu0 %v348
      %532 = vmatpush.msra.mxu0 %v347
      %533 = vmatpush.msra.mxu0 %v346
      %534 = vmatpush.msra.mxu0 %v345
      %535 = vmatpush.msra.mxu0 %v344
      %536 = vmatpush.msra.mxu0 %v343
      %537 = vmatpush.msra.mxu0 %v342
      %538 = vmatpush.msra.mxu0 %v341
      %539 = vmatmul.f32.gmra.mxu0 %v351
      %v540 = vpop.f32.mrf.mxu0
      %v541 = vadd.f32 %v503, %v540
      %542 = vmatmul.f32.gmra.mxu0 %v354
      %v543 = vpop.f32.mrf.mxu0
      %v544 = vadd.f32 %v506, %v543
      %545 = vmatmul.f32.gmra.mxu0 %v357
      %v546 = vpop.f32.mrf.mxu0
      %v547 = vadd.f32 %v509, %v546
      %548 = vmatmul.f32.gmra.mxu0 %v360
      %v549 = vpop.f32.mrf.mxu0
      %v550 = vadd.f32 %v512, %v549
      %551 = vmatmul.f32.gmra.mxu0 %v363
      %v552 = vpop.f32.mrf.mxu0
      %v553 = vadd.f32 %v515, %v552
      %554 = vmatmul.f32.gmra.mxu0 %v366
      %v555 = vpop.f32.mrf.mxu0
      %v556 = vadd.f32 %v518, %v555
      %557 = vmatmul.f32.gmra.mxu0 %v369
      %v558 = vpop.f32.mrf.mxu0
      %v559 = vadd.f32 %v521, %v558
      %560 = vdwg.mxu0
      %v561 = vld [vmem:[%s2] sm:$0x1]
      %v563 = vperm.slane %v561, 0
      %v565 = vmul.f32 %v541, %v563
      %v566 = vmul.f32 %v544, %v563
      %v567 = vmul.f32 %v547, %v563
      %v568 = vmul.f32 %v550, %v563
      %v569 = vmul.f32 %v553, %v563
      %v570 = vmul.f32 %v556, %v563
      %v571 = vmul.f32 %v559, %v563
      %v572 = vld [vmem:[%s3] sm:$0x1]
      %v574 = vperm.slane %v572, 0
      %v576 = vadd.f32 %v565, %v574
      %v577 = vadd.f32 %v566, %v574
      %v578 = vadd.f32 %v567, %v574
      %v579 = vadd.f32 %v568, %v574
      %v580 = vadd.f32 %v569, %v574
      %v581 = vadd.f32 %v570, %v574
      %v582 = vadd.f32 %v571, %v574
      %v583 = vmax.f32 %v576, 0.0
      %v584 = vmax.f32 %v577, 0.0
      %v585 = vmax.f32 %v578, 0.0
      %v586 = vmax.f32 %v579, 0.0
      %v587 = vmax.f32 %v580, 0.0
      %v588 = vmax.f32 %v581, 0.0
      %v589 = vmax.f32 %v582, 0.0
      %597 = vrot.lane.b32.xlu0 %v242, 64
      %v598 = vpop.permute.xlu0 %597
      %599 = vrot.lane.b32.xlu0 %v247, 64
      %v600 = vpop.permute.xlu0 %599
      %601 = vrot.lane.b32.xlu0 %v252, 64
      %v602 = vpop.permute.xlu0 %601
      %603 = vrot.lane.b32.xlu0 %v257, 64
      %v604 = vpop.permute.xlu0 %603
      %605 = vrot.lane.b32.xlu0 %v262, 64
      %v606 = vpop.permute.xlu0 %605
      %607 = vrot.lane.b32.xlu0 %v267, 64
      %v608 = vpop.permute.xlu0 %607
      %609 = vrot.lane.b32.xlu0 %v272, 64
      %v610 = vpop.permute.xlu0 %609
      %v618 = vmax.f32 %v242, %v598
      %v619 = vmax.f32 %v247, %v600
      %v620 = vmax.f32 %v252, %v602
      %v621 = vmax.f32 %v257, %v604
      %v622 = vmax.f32 %v262, %v606
      %v623 = vmax.f32 %v267, %v608
      %v624 = vmax.f32 %v272, %v610
      %v625 = vmax.f32 %v618, %v243
      %v626 = vmax.f32 %v619, %v248
      %v627 = vmax.f32 %v620, %v253
      %v628 = vmax.f32 %v621, %v258
      %v629 = vmax.f32 %v622, %v263
      %v630 = vmax.f32 %v623, %v268
      %v631 = vmax.f32 %v624, %v273
      %639 = vrot.lane.b32.xlu0 %v243, 64
      %v640 = vpop.permute.xlu0 %639
      %641 = vrot.lane.b32.xlu0 %v248, 64
      %v642 = vpop.permute.xlu0 %641
      %643 = vrot.lane.b32.xlu0 %v253, 64
      %v644 = vpop.permute.xlu0 %643
      %645 = vrot.lane.b32.xlu0 %v258, 64
      %v646 = vpop.permute.xlu0 %645
      %647 = vrot.lane.b32.xlu0 %v263, 64
      %v648 = vpop.permute.xlu0 %647
      %649 = vrot.lane.b32.xlu0 %v268, 64
      %v650 = vpop.permute.xlu0 %649
      %651 = vrot.lane.b32.xlu0 %v273, 64
      %v652 = vpop.permute.xlu0 %651
      %v660 = vmax.f32 %v625, %v640
      %v661 = vmax.f32 %v626, %v642
      %v662 = vmax.f32 %v627, %v644
      %v663 = vmax.f32 %v628, %v646
      %v664 = vmax.f32 %v629, %v648
      %v665 = vmax.f32 %v630, %v650
      %v666 = vmax.f32 %v631, %v652
      %v667 = vmax.f32 %v660, %v244
      %v668 = vmax.f32 %v661, %v249
      %v669 = vmax.f32 %v662, %v254
      %v670 = vmax.f32 %v663, %v259
      %v671 = vmax.f32 %v664, %v264
      %v672 = vmax.f32 %v665, %v269
      %v673 = vmax.f32 %v666, %v274
      %681 = vrot.lane.b32.xlu0 %v244, 64
      %v682 = vpop.permute.xlu0 %681
      %683 = vrot.lane.b32.xlu0 %v249, 64
      %v684 = vpop.permute.xlu0 %683
      %685 = vrot.lane.b32.xlu0 %v254, 64
      %v686 = vpop.permute.xlu0 %685
      %687 = vrot.lane.b32.xlu0 %v259, 64
      %v688 = vpop.permute.xlu0 %687
      %689 = vrot.lane.b32.xlu0 %v264, 64
      %v690 = vpop.permute.xlu0 %689
      %691 = vrot.lane.b32.xlu0 %v269, 64
      %v692 = vpop.permute.xlu0 %691
      %693 = vrot.lane.b32.xlu0 %v274, 64
      %v694 = vpop.permute.xlu0 %693
      %v702 = vmax.f32 %v667, %v682
      %v703 = vmax.f32 %v668, %v684
      %v704 = vmax.f32 %v669, %v686
      %v705 = vmax.f32 %v670, %v688
      %v706 = vmax.f32 %v671, %v690
      %v707 = vmax.f32 %v672, %v692
      %v708 = vmax.f32 %v673, %v694
      %v709 = vmax.f32 %v702, %v245
      %v710 = vmax.f32 %v703, %v250
      %v711 = vmax.f32 %v704, %v255
      %v712 = vmax.f32 %v705, %v260
      %v713 = vmax.f32 %v706, %v265
      %v714 = vmax.f32 %v707, %v270
      %v715 = vmax.f32 %v708, %v275
      %723 = vrot.lane.b32.xlu0 %v245, 64
      %v724 = vpop.permute.xlu0 %723
      %725 = vrot.lane.b32.xlu0 %v250, 64
      %v726 = vpop.permute.xlu0 %725
      %727 = vrot.lane.b32.xlu0 %v255, 64
      %v728 = vpop.permute.xlu0 %727
      %729 = vrot.lane.b32.xlu0 %v260, 64
      %v730 = vpop.permute.xlu0 %729
      %731 = vrot.lane.b32.xlu0 %v265, 64
      %v732 = vpop.permute.xlu0 %731
      %733 = vrot.lane.b32.xlu0 %v270, 64
      %v734 = vpop.permute.xlu0 %733
      %735 = vrot.lane.b32.xlu0 %v275, 64
      %v736 = vpop.permute.xlu0 %735
      %v744 = vmax.f32 %v709, %v724
      %v745 = vmax.f32 %v710, %v726
      %v746 = vmax.f32 %v711, %v728
      %v747 = vmax.f32 %v712, %v730
      %v748 = vmax.f32 %v713, %v732
      %v749 = vmax.f32 %v714, %v734
      %v750 = vmax.f32 %v715, %v736
      %v751 = vmax.f32 %v744, %v246
      %v752 = vmax.f32 %v745, %v251
      %v753 = vmax.f32 %v746, %v256
      %v754 = vmax.f32 %v747, %v261
      %v755 = vmax.f32 %v748, %v266
      %v756 = vmax.f32 %v749, %v271
      %v757 = vmax.f32 %v750, %v276
      %765 = vrot.lane.b32.xlu0 %v583, 64
      %v766 = vpop.permute.xlu0 %765
      %767 = vrot.lane.b32.xlu0 %v584, 64
      %v768 = vpop.permute.xlu0 %767
      %769 = vrot.lane.b32.xlu0 %v585, 64
      %v770 = vpop.permute.xlu0 %769
      %771 = vrot.lane.b32.xlu0 %v586, 64
      %v772 = vpop.permute.xlu0 %771
      %773 = vrot.lane.b32.xlu0 %v587, 64
      %v774 = vpop.permute.xlu0 %773
      %775 = vrot.lane.b32.xlu0 %v588, 64
      %v776 = vpop.permute.xlu0 %775
      %777 = vrot.lane.b32.xlu0 %v589, 64
      %v778 = vpop.permute.xlu0 %777
      %v786 = vsel %vm349, %v751, %v766
      %v787 = vsel %vm349, %v752, %v768
      %v788 = vsel %vm349, %v753, %v770
      %v789 = vsel %vm349, %v754, %v772
      %v790 = vsel %vm349, %v755, %v774
      %v791 = vsel %vm349, %v756, %v776
      %v792 = vsel %vm349, %v757, %v778
      %793 = vst [vmem:[%s240] sm:$0xff] %v786
      %vm794 = vcmask 261120
      %795 = vst.msk [vmem:[%s240 + $0x8] sm:$0xff] %vm794, %v766
      %796 = vst [vmem:[%s240 + $0x10] sm:$0xff] %v787
      %797 = vst.msk [vmem:[%s240 + $0x18] sm:$0xff] %vm794, %v768
      %798 = vst [vmem:[%s240 + $0x20] sm:$0xff] %v788
      %799 = vst.msk [vmem:[%s240 + $0x28] sm:$0xff] %vm794, %v770
      %800 = vst [vmem:[%s240 + $0x30] sm:$0xff] %v789
      %801 = vst.msk [vmem:[%s240 + $0x38] sm:$0xff] %vm794, %v772
      %802 = vst [vmem:[%s240 + $0x40] sm:$0xff] %v790
      %803 = vst.msk [vmem:[%s240 + $0x48] sm:$0xff] %vm794, %v774
      %804 = vst [vmem:[%s240 + $0x50] sm:$0xff] %v791
      %805 = vst.msk [vmem:[%s240 + $0x58] sm:$0xff] %vm794, %v776
      %806 = vst [vmem:[%s240 + $0x60] sm:$0x1] %v792
      %vm807 = vcmask 253952
      %808 = vst.msk [vmem:[%s240 + $0x68] sm:$0x1] %vm807, %v778
      %s809 = smul.u32 7, %s20
      %p810 = scmp.lt.s32.totalorder %s19, 1
      %s811 = scalar_select %p810, %s19, 1
      %p812 = scmp.lt.s32.totalorder %s809, 6
      %s813 = scalar_select %p812, %s809, 6
      %s814 = smul.addr %s813, 2
      %s815 = smul.addr %s811, 14
      %s816 = sadd.s32 %s814, %s815
      %s817 = smul.addr %s816, 8
      %s818 = scalar_lea.vmem %s4, %s817
      // Predicated region
      $region37: #{tpu_custom_call.1} parent=35 // pred_check
        %p819 = pneg %p138
      $region38: #{tpu_custom_call.1} parent=35 // pred_check_branch
        %821 = sbr.rel (%p819) target = $region40
      $region39: #{tpu_custom_call.1} parent=35 // pred_region
        %s822 = smul.u32 7, %s20
      $region40: #{tpu_custom_call.1} parent=35 // pred_fallthru
        _
    $region36: #{tpu_custom_call.1} parent=5 // pred_fallthru
      _
    %p823 = scmp.le.s32.totalorder 2, %s10
    // Predicated region
    $region41: #{tpu_custom_call.1} parent=5 // pred_check
      %p824 = pneg %p823
    $region42: #{tpu_custom_call.1} parent=5 // pred_check_branch
      %826 = sbr.rel (%p824) target = $region44
    $region43: #{tpu_custom_call.1} parent=5 // pred_region
      %s827 = ssub.s32 %s10, 2
      // Predicated region
      $region45: #{tpu_custom_call.1} parent=43 // pred_check
        %p828 = pneg %p144
      $region46: #{tpu_custom_call.1} parent=43 // pred_check_branch
        %830 = sbr.rel (%p828) target = $region48
      $region47: #{tpu_custom_call.1} parent=43 // pred_region
        %s831 = smul.u32 7, %s22
        %p832 = scmp.lt.s32.totalorder %s21, 1
        %s833 = scalar_select %p832, %s21, 1
        %p834 = scmp.lt.s32.totalorder %s831, 6
        %s835 = scalar_select %p834, %s831, 6
        %s836 = smul.addr %s835, 2
        %s837 = smul.addr %s833, 14
        %s838 = sadd.s32 %s836, %s837
        %s839 = smul.addr %s838, 8
        %s840 = scalar_lea.vmem %s4, %s839
      $region48: #{tpu_custom_call.1} parent=43 // pred_fallthru
        _
    $region44: #{tpu_custom_call.1} parent=5 // pred_fallthru
      _
  $region6: #{tpu_custom_call.1} parent=0 // loop_footer
    %s14 = sadd.s32 1, %s10
  $region7: #{tpu_custom_call.1} parent=0 // loop_footer_branch
    %9 = sbr.rel target = $region3
  $region8: #{tpu_custom_call.1} parent=0 // loop_exit
    _

</llo_original>
